<compile_context>
chip_gen: v7x
topology: tpu7x:2x2x1
jax: 0.10.0
libtpu: 0.0.40
codegen_flags: <defaults>
</compile_context>

<pallas_src>
import jax
import jax.numpy as jnp
from jax import lax
from jax.experimental import pallas as pl
from jax.experimental.pallas import tpu as pltpu


def _round_up(x, m):
    return (x + m - 1) // m * m


def _mf_kernel(u_ref, i_ref, ufT_ref, ifT_ref, out_ref):
    # u_ref / i_ref   : VMEM (1, TB) int32   -- this step's index block
    # ufT_ref         : VMEM (F_pad, Nu_pad) -- factor-major user table (resident)
    # ifT_ref         : VMEM (F_pad, Ni_pad) -- factor-major item table (resident)
    # out_ref         : VMEM (1, TB) float32 -- this step's output block
    nu = ufT_ref.shape[1]
    ni = ifT_ref.shape[1]
    tb = out_ref.shape[1]

    u_idx = u_ref[...]                                   # (1, TB) int32
    i_idx = i_ref[...]                                   # (1, TB) int32

    # One-hot gather matrices via broadcasted-iota compare (N_pad, TB).
    oh_u = (lax.broadcasted_iota(jnp.int32, (nu, tb), 0) == u_idx).astype(ufT_ref.dtype)
    oh_i = (lax.broadcasted_iota(jnp.int32, (ni, tb), 0) == i_idx).astype(ifT_ref.dtype)

    # MXU gathers: (F_pad, N_pad) @ (N_pad, TB) -> (F_pad, TB), lane-dense.
    gu = jnp.dot(ufT_ref[...], oh_u, preferred_element_type=jnp.float32)
    gi = jnp.dot(ifT_ref[...], oh_i, preferred_element_type=jnp.float32)

    # Elementwise product + sublane (factor-axis) reduction; padded factor rows
    # are zero so they do not contribute.  Single unmasked (1, TB) store.
    out_ref[...] = jnp.sum(gu * gi, axis=0, keepdims=True).astype(out_ref.dtype)


def matrix_factorization_forward(data, user_factors, item_factors,
                                 *, block_rows=1024):
    """data: (B, 2) int [user_id, item_id]; returns (B,) dot(user_emb, item_emb)."""
    B = data.shape[0]
    n_users, F = user_factors.shape
    n_items, F2 = item_factors.shape
    assert F == F2, "user/item factor dims must match"

    # Clamp indices: Pallas does no runtime bounds check on VMEM accesses.
    users = jnp.clip(data[:, 0].astype(jnp.int32), 0, n_users - 1)
    items = jnp.clip(data[:, 1].astype(jnp.int32), 0, n_items - 1)

    # Batch tiling: TB rows per grid step (lane-dense multiple of 128).
    block_rows = _round_up(max(int(block_rows), 128), 128)
    TB = min(block_rows, _round_up(B, 128))
    B_pad = _round_up(B, TB)
    G = B_pad // TB

    pad = B_pad - B
    if pad:
        # Pad with index 0 (always valid); padded outputs are sliced away below.
        users = jnp.concatenate([users, jnp.zeros((pad,), jnp.int32)])
        items = jnp.concatenate([items, jnp.zeros((pad,), jnp.int32)])
    users2d = users.reshape(G, TB)
    items2d = items.reshape(G, TB)

    # Factor-major, tile-padded resident tables (zero padded -> padded factor
    # rows / table columns contribute nothing).
    F_pad = _round_up(F, 8)
    Nu_pad = _round_up(n_users, 128)
    Ni_pad = _round_up(n_items, 128)
    ufT = jnp.zeros((F_pad, Nu_pad), user_factors.dtype).at[:F, :n_users].set(user_factors.T)
    ifT = jnp.zeros((F_pad, Ni_pad), item_factors.dtype).at[:F, :n_items].set(item_factors.T)

    # Padding-aware VMEM budget, clamped to this generation's capacity.
    u_isz = jnp.dtype(user_factors.dtype).itemsize
    i_isz = jnp.dtype(item_factors.dtype).itemsize
    table_bytes = F_pad * Nu_pad * u_isz + F_pad * Ni_pad * i_isz
    idx_bytes = 2 * 2 * 8 * TB * 4            # two index inputs, 2x buffered, sublane-padded
    out_bytes = 2 * 8 * TB * 4                # output block, 2x buffered, sublane-padded
    onehot_bytes = (Nu_pad + Ni_pad) * TB * 4  # one-hot temporaries
    gath_bytes = 2 * F_pad * TB * 4            # gathered (F_pad, TB) temporaries
    needed = table_bytes + idx_bytes + out_bytes + onehot_bytes + gath_bytes + (8 << 20)
    try:
        vmem_cap = int(pltpu.get_tpu_info().vmem_capacity_bytes)
    except Exception:  # pragma: no cover - conservative fallback (v7x size)
        vmem_cap = 64 << 20
    vmem_limit = int(min(max(needed, 32 << 20), int(vmem_cap * 0.9)))

    out = pl.pallas_call(
        _mf_kernel,
        out_shape=jax.ShapeDtypeStruct((G, TB), jnp.float32),
        grid_spec=pltpu.PrefetchScalarGridSpec(
            num_scalar_prefetch=0,
            grid=(G,),
            in_specs=[
                # Per-step (1, TB) index blocks.
                pl.BlockSpec((1, TB), lambda g: (g, 0)),
                pl.BlockSpec((1, TB), lambda g: (g, 0)),
                # Whole-array, un-pipelined VMEM-resident tables.
                pl.BlockSpec(memory_space=pltpu.MemorySpace.VMEM),
                pl.BlockSpec(memory_space=pltpu.MemorySpace.VMEM),
            ],
            # Lane-dense per-step output block.
            out_specs=pl.BlockSpec((1, TB), lambda g: (g, 0)),
        ),
        compiler_params=pltpu.CompilerParams(
            dimension_semantics=("parallel",),
            vmem_limit_bytes=vmem_limit,
        ),
    )(users2d, items2d, ufT, ifT)

    return out.reshape(B_pad)[:B].astype(user_factors.dtype)


if __name__ == "__main__":
    # Small, deterministic problem consistent with the module's __init__.
    n_users, n_items, n_factors = 16, 12, 20
    batch = 8

    key = jax.random.PRNGKey(0)
    k_user, k_item, k_u_idx, k_i_idx = jax.random.split(key, 4)

    # torch.nn.Embedding default init: N(0, 1) for user_factors.
    user_factors = jax.random.normal(k_user, (n_users, n_factors), jnp.float32)
    # item_factors.weight.data.uniform_(0, 0.05) (applied twice; same dist).
    item_factors = jax.random.uniform(
        k_item, (n_items, n_factors), jnp.float32, minval=0.0, maxval=0.05)

    users = jax.random.randint(k_u_idx, (batch,), 0, n_users, jnp.int32)
    items = jax.random.randint(k_i_idx, (batch,), 0, n_items, jnp.int32)
    data = jnp.stack([users, items], axis=1)          # (B, 2) int32

    out = matrix_factorization_forward(data, user_factors, item_factors)
    out = jax.block_until_ready(out)

    # Pure-JAX reference for correctness.  Tolerance is modest because the
    # one-hot gather runs on the MXU, whose f32 path may round intermediate
    # operands; any indexing bug would produce O(0.1-1) errors, far above this.
    ref = jnp.sum(user_factors[users] * item_factors[items], axis=1)
    assert out.shape == (batch,)
    assert jnp.allclose(out, ref, atol=2e-2, rtol=2e-2), (out, ref)

    print("KERNEL_OK")
</pallas_src>

<mosaic_0001>
module attributes {stable_mosaic.version = 11 : i64} {
  func.func @_mf_kernel(%arg0: i32, %arg1: memref<1x128xi32, #tpu.memory_space<vmem>>, %arg2: memref<1x128xi32, #tpu.memory_space<vmem>>, %arg3: memref<24x128xf32, #tpu.memory_space<vmem>>, %arg4: memref<24x128xf32, #tpu.memory_space<vmem>>, %arg5: memref<1x128xf32, #tpu.memory_space<vmem>>) attributes {dimension_semantics = [#tpu.dimension_semantics<parallel>], iteration_bounds = array<i64: 1>, scalar_prefetch = 0 : i64, scratch_operands = 0 : i64, tpu.core_type = #tpu.core_type<tc>, window_params = [{transform_indices = @transform_0, window_bounds = array<i64: 1, 128>}, {transform_indices = @transform_1, window_bounds = array<i64: 1, 128>}, {pipeline_mode = #tpu.pipeline_mode<synchronous>, transform_indices = @transform_2, window_bounds = array<i64: 24, 128>}, {pipeline_mode = #tpu.pipeline_mode<synchronous>, transform_indices = @transform_3, window_bounds = array<i64: 24, 128>}, {transform_indices = @transform_4, window_bounds = array<i64: 1, 128>}]} {
    %c0 = arith.constant 0 : index
    %c0_0 = arith.constant 0 : index
    %0 = vector.load %arg1[%c0, %c0_0] : memref<1x128xi32, #tpu.memory_space<vmem>>, vector<1x128xi32>
    %c0_1 = arith.constant 0 : index
    %c0_2 = arith.constant 0 : index
    %1 = vector.load %arg2[%c0_1, %c0_2] : memref<1x128xi32, #tpu.memory_space<vmem>>, vector<1x128xi32>
    %2 = tpu.iota {dimensions = array<i32: 0>} : vector<128x128xi32>
    %3 = vector.broadcast %0 : vector<1x128xi32> to vector<128x128xi32>
    %4 = arith.cmpi eq, %2, %3 : vector<128x128xi32>
    %5 = arith.extui %4 : vector<128x128xi1> to vector<128x128xi32>
    %6 = arith.sitofp %5 : vector<128x128xi32> to vector<128x128xf32>
    %7 = tpu.iota {dimensions = array<i32: 0>} : vector<128x128xi32>
    %8 = vector.broadcast %1 : vector<1x128xi32> to vector<128x128xi32>
    %9 = arith.cmpi eq, %7, %8 : vector<128x128xi32>
    %10 = arith.extui %9 : vector<128x128xi1> to vector<128x128xi32>
    %11 = arith.sitofp %10 : vector<128x128xi32> to vector<128x128xf32>
    %c0_3 = arith.constant 0 : index
    %c0_4 = arith.constant 0 : index
    %12 = vector.load %arg3[%c0_3, %c0_4] : memref<24x128xf32, #tpu.memory_space<vmem>>, vector<24x128xf32>
    %cst = arith.constant dense<0.000000e+00> : vector<24x128xf32>
    %13 = tpu.matmul %12, %6, %cst {dimension_numbers = #tpu.dot_dimension_numbers<[1], [0], [0], [1], [0, 0, 1, 1], [], []>} : vector<24x128xf32>, vector<128x128xf32>, vector<24x128xf32> -> vector<24x128xf32>
    %c0_5 = arith.constant 0 : index
    %c0_6 = arith.constant 0 : index
    %14 = vector.load %arg4[%c0_5, %c0_6] : memref<24x128xf32, #tpu.memory_space<vmem>>, vector<24x128xf32>
    %cst_7 = arith.constant dense<0.000000e+00> : vector<24x128xf32>
    %15 = tpu.matmul %14, %11, %cst_7 {dimension_numbers = #tpu.dot_dimension_numbers<[1], [0], [0], [1], [0, 0, 1, 1], [], []>} : vector<24x128xf32>, vector<128x128xf32>, vector<24x128xf32> -> vector<24x128xf32>
    %16 = arith.mulf %13, %15 : vector<24x128xf32>
    %cst_8 = arith.constant dense<0.000000e+00> : vector<128xf32>
    %17 = vector.multi_reduction <add>, %16, %cst_8 [0] : vector<24x128xf32> to vector<128xf32>
    %18 = vector.shape_cast %17 : vector<128xf32> to vector<1x128xf32>
    %c0_9 = arith.constant 0 : index
    %c0_10 = arith.constant 0 : index
    %19 = vector.load %arg5[%c0_9, %c0_10] : memref<1x128xf32, #tpu.memory_space<vmem>>, vector<1x128xf32>
    tpu.vector_store %arg5[%c0_9, %c0_10], %18 {strides = array<i32>} : memref<1x128xf32, #tpu.memory_space<vmem>>, vector<1x128xf32>,
    return
  }
  func.func @transform_0(%arg0: i32) -> (i32, i32) {
    %c0_i32 = arith.constant 0 : i32
    %c0_i32_0 = arith.constant 0 : i32
    return %arg0, %c0_i32 : i32, i32
  }
  func.func @transform_1(%arg0: i32) -> (i32, i32) {
    %c0_i32 = arith.constant 0 : i32
    %c0_i32_0 = arith.constant 0 : i32
    return %arg0, %c0_i32 : i32, i32
  }
  func.func @transform_2(%arg0: i32) -> (i32, i32) {
    %c0_i32 = arith.constant 0 : i32
    %c0_i32_0 = arith.constant 0 : i32
    %c0_i32_1 = arith.constant 0 : i32
    return %c0_i32, %c0_i32_0 : i32, i32
  }
  func.func @transform_3(%arg0: i32) -> (i32, i32) {
    %c0_i32 = arith.constant 0 : i32
    %c0_i32_0 = arith.constant 0 : i32
    %c0_i32_1 = arith.constant 0 : i32
    return %c0_i32, %c0_i32_0 : i32, i32
  }
  func.func @transform_4(%arg0: i32) -> (i32, i32) {
    %c0_i32 = arith.constant 0 : i32
    %c0_i32_0 = arith.constant 0 : i32
    return %arg0, %c0_i32 : i32, i32
  }
}

</mosaic_0001>

<llo_original>
// kernel: tpu_custom_call.1
$region0: #{tpu_custom_call.1}
  #allocation0 [shape = 'u32[]', space=smem, size = 0x4, offset = 0x4, fixed_abs, tag = 'smem constant byte address 0x4 - core index']
  #allocation1 [shape = 'u32[144,128]{1,0:T(1,128)}', space=vmem, size = 0x12000, scoped, tag = 'internal scratch']
  %s0 = inlined_call_operand.hbm [shape: s32[1,128], index: 0, kind: input, shape index: {}]
  %s1 = inlined_call_operand.vmem [shape: s32[1,128], index: 1, kind: input, shape index: {}]
  %s2 = inlined_call_operand.hbm [shape: f32[24,128], index: 2, kind: input, shape index: {}]
  %s3 = inlined_call_operand.hbm [shape: f32[24,128], index: 3, kind: input, shape index: {}]
  %s4 = inlined_call_operand.hbm [shape: f32[1,128], index: 4, kind: output, shape index: {}]
  %s5 = sld [smem:[#allocation0]]
  $region38: #{tpu_custom_call.1} parent=0
    _
  %s7 = ssub.s32 1, %s5
  %s8 = scalar_select 0, %s7, %s5
  $region1: #{tpu_custom_call.1} parent=0
    #allocation2 [shape = 'u8[512]{0}', space=vmem, size = 0x400, scoped, tag = 'input window, operand 0, single buffered']
    #allocation3 [shape = 's32[1]{0}', space=sflag, size = 0x4, scoped, tag = 'scoped memory for tpu_custom_call.1']
    #allocation4 [shape = 's32[1]{0}', space=sflag, size = 0x4, scoped, tag = 'scoped memory for tpu_custom_call.1']
    #allocation5 [shape = 'u8[12288]{0}', space=vmem, size = 0x3000, scoped, tag = 'input window, operand 2, single buffered']
    #allocation6 [shape = 's32[1]{0}', space=sflag, size = 0x4, scoped, tag = 'scoped memory for tpu_custom_call.1']
    #allocation7 [shape = 'u8[12288]{0}', space=vmem, size = 0x3000, scoped, tag = 'input window, operand 3, single buffered']
    #allocation8 [shape = 'u8[512]{0}', space=vmem, size = 0x400, scoped, tag = 'output window, operand 0, single buffered']
    %9 = vsyncpa [#allocation3], 0
    %10 = vsyncpa [#allocation6], 0
    %11 = vsyncpa [#allocation4], 0
    // Predicated region
    $region2: #{tpu_custom_call.1} parent=1 // pred_check
      _
    $region3: #{tpu_custom_call.1} parent=1 // pred_check_branch
      %13 = sbr.rel (0) target = $region5
    $region4: #{tpu_custom_call.1} parent=1 // pred_region
      %s15 = ssub.s32 16, 16
      %16 = vsyncadd [#allocation3], %s15
      %s18 = sshll.u32 [#allocation2], 4
      %s19 = int_to_ptr.vmem [resolvable:$true] %s18
      %21 = dma.hbm_to_vmem [thread:$0]  %s0, 16, %s19, [#allocation3]
    $region5: #{tpu_custom_call.1} parent=1 // pred_fallthru
      _
    // Predicated region
    $region6: #{tpu_custom_call.1} parent=1 // pred_check
      _
    $region7: #{tpu_custom_call.1} parent=1 // pred_check_branch
      %23 = sbr.rel (0) target = $region9
    $region8: #{tpu_custom_call.1} parent=1 // pred_region
      _
    $region9: #{tpu_custom_call.1} parent=1 // pred_fallthru
      _
    // Predicated region
    $region10: #{tpu_custom_call.1} parent=1 // pred_check
      _
    $region11: #{tpu_custom_call.1} parent=1 // pred_check_branch
      %25 = sbr.rel (0) target = $region13
    $region12: #{tpu_custom_call.1} parent=1 // pred_region
      %s27 = ssub.s32 384, 384
      %28 = vsyncadd [#allocation6], %s27
      %s29 = sshll.u32 [#allocation5], 4
      %s30 = int_to_ptr.vmem [resolvable:$true] %s29
      %35 = dma.hbm_to_vmem [thread:$0]  %s2, 384, %s30, [#allocation6], 128, 128, 8
    $region13: #{tpu_custom_call.1} parent=1 // pred_fallthru
      _
    // Predicated region
    $region14: #{tpu_custom_call.1} parent=1 // pred_check
      _
    $region15: #{tpu_custom_call.1} parent=1 // pred_check_branch
      %37 = sbr.rel (0) target = $region17
    $region16: #{tpu_custom_call.1} parent=1 // pred_region
      %s39 = ssub.s32 384, 384
      %40 = vsyncadd [#allocation6], %s39
      %s41 = sshll.u32 [#allocation7], 4
      %s42 = int_to_ptr.vmem [resolvable:$true] %s41
      %47 = dma.hbm_to_vmem [thread:$0]  %s3, 384, %s42, [#allocation6], 128, 128, 8
    $region17: #{tpu_custom_call.1} parent=1 // pred_fallthru
      _
    // Predicated region
    $region18: #{tpu_custom_call.1} parent=1 // pred_check
      _
    $region19: #{tpu_custom_call.1} parent=1 // pred_check_branch
      %49 = sbr.rel (0) target = $region21
    $region20: #{tpu_custom_call.1} parent=1 // pred_region
      %50 = dma.done [#allocation3], 16
    $region21: #{tpu_custom_call.1} parent=1 // pred_fallthru
      _
    // Predicated region
    $region22: #{tpu_custom_call.1} parent=1 // pred_check
      _
    $region23: #{tpu_custom_call.1} parent=1 // pred_check_branch
      %52 = sbr.rel (0) target = $region25
    $region24: #{tpu_custom_call.1} parent=1 // pred_region
      %53 = dma.done [#allocation6], 384
    $region25: #{tpu_custom_call.1} parent=1 // pred_fallthru
      _
    // Predicated region
    $region26: #{tpu_custom_call.1} parent=1 // pred_check
      _
    $region27: #{tpu_custom_call.1} parent=1 // pred_check_branch
      %55 = sbr.rel (0) target = $region29
    $region28: #{tpu_custom_call.1} parent=1 // pred_region
      %56 = dma.done [#allocation6], 384
    $region29: #{tpu_custom_call.1} parent=1 // pred_fallthru
      _
    %v57 = vld [vmem:[#allocation2] sm:$0x1]
    %v58 = vld [vmem:[%s1] sm:$0x1]
    %v59 = vlaneseq
    %v60 = vshrl.u32 %v59, 7
    %v61 = vadd.s32 %v60, 8
    %v62 = vadd.s32 %v60, 16
    %v63 = vadd.s32 %v60, 24
    %v64 = vadd.s32 %v60, 32
    %v65 = vadd.s32 %v60, 40
    %v66 = vadd.s32 %v60, 48
    %v67 = vadd.s32 %v60, 56
    %v68 = vadd.s32 %v60, 64
    %v69 = vadd.s32 %v60, 72
    %v70 = vadd.s32 %v60, 80
    %v71 = vadd.s32 %v60, 88
    %v72 = vadd.s32 %v60, 96
    %v73 = vadd.s32 %v60, 104
    %v74 = vadd.s32 %v60, 112
    %v75 = vadd.s32 %v60, 120
    %v76 = vlaneseq
    %v77 = vshrl.u32 %v76, 7
    %v78 = vsub.s32 0, %v77
    %v79 = vrot.slane %v57, %v78
    %vm80 = vcmp.eq.s32.totalorder %v60, %v79
    %vm81 = vcmp.eq.s32.totalorder %v61, %v79
    %vm82 = vcmp.eq.s32.totalorder %v62, %v79
    %vm83 = vcmp.eq.s32.totalorder %v63, %v79
    %vm84 = vcmp.eq.s32.totalorder %v64, %v79
    %vm85 = vcmp.eq.s32.totalorder %v65, %v79
    %vm86 = vcmp.eq.s32.totalorder %v66, %v79
    %vm87 = vcmp.eq.s32.totalorder %v67, %v79
    %vm88 = vcmp.eq.s32.totalorder %v68, %v79
    %vm89 = vcmp.eq.s32.totalorder %v69, %v79
    %vm90 = vcmp.eq.s32.totalorder %v70, %v79
    %vm91 = vcmp.eq.s32.totalorder %v71, %v79
    %vm92 = vcmp.eq.s32.totalorder %v72, %v79
    %vm93 = vcmp.eq.s32.totalorder %v73, %v79
    %vm94 = vcmp.eq.s32.totalorder %v74, %v79
    %vm95 = vcmp.eq.s32.totalorder %v75, %v79
    %v96 = vsel %vm80, 1, 0
    %v97 = vsel %vm81, 1, 0
    %v98 = vsel %vm82, 1, 0
    %v99 = vsel %vm83, 1, 0
    %v100 = vsel %vm84, 1, 0
    %v101 = vsel %vm85, 1, 0
    %v102 = vsel %vm86, 1, 0
    %v103 = vsel %vm87, 1, 0
    %v104 = vsel %vm88, 1, 0
    %v105 = vsel %vm89, 1, 0
    %v106 = vsel %vm90, 1, 0
    %v107 = vsel %vm91, 1, 0
    %v108 = vsel %vm92, 1, 0
    %v109 = vsel %vm93, 1, 0
    %v110 = vsel %vm94, 1, 0
    %v111 = vsel %vm95, 1, 0
    %v112 = vcvt.s32.f32 %v96
    %v113 = vcvt.s32.f32 %v97
    %v114 = vcvt.s32.f32 %v98
    %v115 = vcvt.s32.f32 %v99
    %v116 = vcvt.s32.f32 %v100
    %v117 = vcvt.s32.f32 %v101
    %v118 = vcvt.s32.f32 %v102
    %v119 = vcvt.s32.f32 %v103
    %v120 = vcvt.s32.f32 %v104
    %v121 = vcvt.s32.f32 %v105
    %v122 = vcvt.s32.f32 %v106
    %v123 = vcvt.s32.f32 %v107
    %v124 = vcvt.s32.f32 %v108
    %v125 = vcvt.s32.f32 %v109
    %v126 = vcvt.s32.f32 %v110
    %v127 = vcvt.s32.f32 %v111
    %v128 = vlaneseq
    %v129 = vshrl.u32 %v128, 7
    %v130 = vsub.s32 0, %v129
    %v131 = vrot.slane %v58, %v130
    %vm132 = vcmp.eq.s32.totalorder %v60, %v131
    %vm133 = vcmp.eq.s32.totalorder %v61, %v131
    %vm134 = vcmp.eq.s32.totalorder %v62, %v131
    %vm135 = vcmp.eq.s32.totalorder %v63, %v131
    %vm136 = vcmp.eq.s32.totalorder %v64, %v131
    %vm137 = vcmp.eq.s32.totalorder %v65, %v131
    %vm138 = vcmp.eq.s32.totalorder %v66, %v131
    %vm139 = vcmp.eq.s32.totalorder %v67, %v131
    %vm140 = vcmp.eq.s32.totalorder %v68, %v131
    %vm141 = vcmp.eq.s32.totalorder %v69, %v131
    %vm142 = vcmp.eq.s32.totalorder %v70, %v131
    %vm143 = vcmp.eq.s32.totalorder %v71, %v131
    %vm144 = vcmp.eq.s32.totalorder %v72, %v131
    %vm145 = vcmp.eq.s32.totalorder %v73, %v131
    %vm146 = vcmp.eq.s32.totalorder %v74, %v131
    %vm147 = vcmp.eq.s32.totalorder %v75, %v131
    %v148 = vsel %vm132, 1, 0
    %v149 = vsel %vm133, 1, 0
    %v150 = vsel %vm134, 1, 0
    %v151 = vsel %vm135, 1, 0
    %v152 = vsel %vm136, 1, 0
    %v153 = vsel %vm137, 1, 0
    %v154 = vsel %vm138, 1, 0
    %v155 = vsel %vm139, 1, 0
    %v156 = vsel %vm140, 1, 0
    %v157 = vsel %vm141, 1, 0
    %v158 = vsel %vm142, 1, 0
    %v159 = vsel %vm143, 1, 0
    %v160 = vsel %vm144, 1, 0
    %v161 = vsel %vm145, 1, 0
    %v162 = vsel %vm146, 1, 0
    %v163 = vsel %vm147, 1, 0
    %v164 = vcvt.s32.f32 %v148
    %v165 = vcvt.s32.f32 %v149
    %v166 = vcvt.s32.f32 %v150
    %v167 = vcvt.s32.f32 %v151
    %v168 = vcvt.s32.f32 %v152
    %v169 = vcvt.s32.f32 %v153
    %v170 = vcvt.s32.f32 %v154
    %v171 = vcvt.s32.f32 %v155
    %v172 = vcvt.s32.f32 %v156
    %v173 = vcvt.s32.f32 %v157
    %v174 = vcvt.s32.f32 %v158
    %v175 = vcvt.s32.f32 %v159
    %v176 = vcvt.s32.f32 %v160
    %v177 = vcvt.s32.f32 %v161
    %v178 = vcvt.s32.f32 %v162
    %v179 = vcvt.s32.f32 %v163
    %v180 = vld [vmem:[#allocation5] sm:$0xff]
    %v181 = vld [vmem:[#allocation5 + $0x8] sm:$0xff]
    %v182 = vld [vmem:[#allocation5 + $0x10] sm:$0xff]
    %183 = vmatprep.subr.mxu0 0.0
    %184 = vmatpush1.msra.mxu0 %v112
    %185 = vmatprep.subr.mxu0 0.0
    %186 = vmatpush1.msra.mxu0 %v113
    %187 = vmatprep.subr.mxu0 0.0
    %188 = vmatpush1.msra.mxu0 %v114
    %189 = vmatprep.subr.mxu0 0.0
    %190 = vmatpush1.msra.mxu0 %v115
    %191 = vmatprep.subr.mxu0 0.0
    %192 = vmatpush1.msra.mxu0 %v116
    %193 = vmatprep.subr.mxu0 0.0
    %194 = vmatpush1.msra.mxu0 %v117
    %195 = vmatprep.subr.mxu0 0.0
    %196 = vmatpush1.msra.mxu0 %v118
    %197 = vmatprep.subr.mxu0 0.0
    %198 = vmatpush1.msra.mxu0 %v119
    %199 = vmatprep.subr.mxu0 0.0
    %200 = vmatpush1.msra.mxu0 %v120
    %201 = vmatprep.subr.mxu0 0.0
    %202 = vmatpush1.msra.mxu0 %v121
    %203 = vmatprep.subr.mxu0 0.0
    %204 = vmatpush1.msra.mxu0 %v122
    %205 = vmatprep.subr.mxu0 0.0
    %206 = vmatpush1.msra.mxu0 %v123
    %207 = vmatprep.subr.mxu0 0.0
    %208 = vmatpush1.msra.mxu0 %v124
    %209 = vmatprep.subr.mxu0 0.0
    %210 = vmatpush1.msra.mxu0 %v125
    %211 = vmatprep.subr.mxu0 0.0
    %212 = vmatpush1.msra.mxu0 %v126
    %213 = vmatprep.subr.mxu0 0.0
    %214 = vmatpush1.msra.mxu0 %v127
    %215 = vmatprep.subr.mxu0 0.0
    %216 = vmatpush1.msra.mxu0 0.0
    %217 = vmatprep.subr.mxu0 0.0
    %218 = vmatpush1.msra.mxu0 0.0
    %219 = vmatprep.subr.mxu0 0.0
    %220 = vmatpush1.msra.mxu0 0.0
    %221 = vmatprep.subr.mxu0 0.0
    %222 = vmatpush1.msra.mxu0 0.0
    %223 = vmatprep.subr.mxu0 0.0
    %224 = vmatpush1.msra.mxu0 0.0
    %225 = vmatprep.subr.mxu0 0.0
    %226 = vmatpush1.msra.mxu0 0.0
    %227 = vmatprep.subr.mxu0 0.0
    %228 = vmatpush1.msra.mxu0 0.0
    %229 = vmatprep.subr.mxu0 0.0
    %230 = vmatpush1.msra.mxu0 0.0
    %231 = vmatprep.subr.mxu0 0.0
    %232 = vmatpush1.msra.mxu0 0.0
    %233 = vmatprep.subr.mxu0 0.0
    %234 = vmatpush1.msra.mxu0 0.0
    %235 = vmatprep.subr.mxu0 0.0
    %236 = vmatpush1.msra.mxu0 0.0
    %237 = vmatprep.subr.mxu0 0.0
    %238 = vmatpush1.msra.mxu0 0.0
    %239 = vmatprep.subr.mxu0 0.0
    %240 = vmatpush1.msra.mxu0 0.0
    %241 = vmatprep.subr.mxu0 0.0
    %242 = vmatpush1.msra.mxu0 0.0
    %243 = vmatprep.subr.mxu0 0.0
    %244 = vmatpush1.msra.mxu0 0.0
    %245 = vmatprep.subr.mxu0 0.0
    %246 = vmatpush1.msra.mxu0 0.0
    %247 = vmatprep.mubr.f32.mxu0 0.0
    %248 = vmatmul.mubr.f32.gmra.mrb[0].mxu0 %v180
    %v249 = vpop.f32.mrb[0].mxu0
    %v250 = vadd.f32 0.0, %v249
    %v251 = vpop.f32.mrb[0].mxu0
    %252 = vmatprep.mubr.f32.mxu0 0.0
    %253 = vmatmul.mubr.f32.gmra.mrb[0].mxu0 %v181
    %v254 = vpop.f32.mrb[0].mxu0
    %v255 = vadd.f32 0.0, %v254
    %v256 = vpop.f32.mrb[0].mxu0
    %257 = vmatprep.mubr.f32.mxu0 0.0
    %258 = vmatmul.mubr.f32.gmra.mrb[0].mxu0 %v182
    %v259 = vpop.f32.mrb[0].mxu0
    %v260 = vadd.f32 0.0, %v259
    %v261 = vpop.f32.mrb[0].mxu0
    %262 = vdwg.mxu0
    %v263 = vld [vmem:[#allocation7] sm:$0xff]
    %v264 = vld [vmem:[#allocation7 + $0x8] sm:$0xff]
    %v265 = vld [vmem:[#allocation7 + $0x10] sm:$0xff]
    %266 = vmatprep.subr.mxu0 0.0
    %267 = vmatpush1.msra.mxu0 %v164
    %268 = vmatprep.subr.mxu0 0.0
    %269 = vmatpush1.msra.mxu0 %v165
    %270 = vmatprep.subr.mxu0 0.0
    %271 = vmatpush1.msra.mxu0 %v166
    %272 = vmatprep.subr.mxu0 0.0
    %273 = vmatpush1.msra.mxu0 %v167
    %274 = vmatprep.subr.mxu0 0.0
    %275 = vmatpush1.msra.mxu0 %v168
    %276 = vmatprep.subr.mxu0 0.0
    %277 = vmatpush1.msra.mxu0 %v169
    %278 = vmatprep.subr.mxu0 0.0
    %279 = vmatpush1.msra.mxu0 %v170
    %280 = vmatprep.subr.mxu0 0.0
    %281 = vmatpush1.msra.mxu0 %v171
    %282 = vmatprep.subr.mxu0 0.0
    %283 = vmatpush1.msra.mxu0 %v172
    %284 = vmatprep.subr.mxu0 0.0
    %285 = vmatpush1.msra.mxu0 %v173
    %286 = vmatprep.subr.mxu0 0.0
    %287 = vmatpush1.msra.mxu0 %v174
    %288 = vmatprep.subr.mxu0 0.0
    %289 = vmatpush1.msra.mxu0 %v175
    %290 = vmatprep.subr.mxu0 0.0
    %291 = vmatpush1.msra.mxu0 %v176
    %292 = vmatprep.subr.mxu0 0.0
    %293 = vmatpush1.msra.mxu0 %v177
    %294 = vmatprep.subr.mxu0 0.0
    %295 = vmatpush1.msra.mxu0 %v178
    %296 = vmatprep.subr.mxu0 0.0
    %297 = vmatpush1.msra.mxu0 %v179
    %298 = vmatprep.subr.mxu0 0.0
    %299 = vmatpush1.msra.mxu0 0.0
    %300 = vmatprep.subr.mxu0 0.0
    %301 = vmatpush1.msra.mxu0 0.0
    %302 = vmatprep.subr.mxu0 0.0
    %303 = vmatpush1.msra.mxu0 0.0
    %304 = vmatprep.subr.mxu0 0.0
    %305 = vmatpush1.msra.mxu0 0.0
    %306 = vmatprep.subr.mxu0 0.0
    %307 = vmatpush1.msra.mxu0 0.0
    %308 = vmatprep.subr.mxu0 0.0
    %309 = vmatpush1.msra.mxu0 0.0
    %310 = vmatprep.subr.mxu0 0.0
    %311 = vmatpush1.msra.mxu0 0.0
    %312 = vmatprep.subr.mxu0 0.0
    %313 = vmatpush1.msra.mxu0 0.0
    %314 = vmatprep.subr.mxu0 0.0
    %315 = vmatpush1.msra.mxu0 0.0
    %316 = vmatprep.subr.mxu0 0.0
    %317 = vmatpush1.msra.mxu0 0.0
    %318 = vmatprep.subr.mxu0 0.0
    %319 = vmatpush1.msra.mxu0 0.0
    %320 = vmatprep.subr.mxu0 0.0
    %321 = vmatpush1.msra.mxu0 0.0
    %322 = vmatprep.subr.mxu0 0.0
    %323 = vmatpush1.msra.mxu0 0.0
    %324 = vmatprep.subr.mxu0 0.0
    %325 = vmatpush1.msra.mxu0 0.0
    %326 = vmatprep.subr.mxu0 0.0
    %327 = vmatpush1.msra.mxu0 0.0
    %328 = vmatprep.subr.mxu0 0.0
    %329 = vmatpush1.msra.mxu0 0.0
    %330 = vmatprep.mubr.f32.mxu0 0.0
    %331 = vmatmul.mubr.f32.gmra.mrb[0].mxu0 %v263
    %v332 = vpop.f32.mrb[0].mxu0
    %v333 = vadd.f32 0.0, %v332
    %v334 = vpop.f32.mrb[0].mxu0
    %335 = vmatprep.mubr.f32.mxu0 0.0
    %336 = vmatmul.mubr.f32.gmra.mrb[0].mxu0 %v264
    %v337 = vpop.f32.mrb[0].mxu0
    %v338 = vadd.f32 0.0, %v337
    %v339 = vpop.f32.mrb[0].mxu0
    %340 = vmatprep.mubr.f32.mxu0 0.0
    %341 = vmatmul.mubr.f32.gmra.mrb[0].mxu0 %v265
    %v342 = vpop.f32.mrb[0].mxu0
    %v343 = vadd.f32 0.0, %v342
    %v344 = vpop.f32.mrb[0].mxu0
    %345 = vdwg.mxu0
    %v346 = vmul.f32 %v250, %v333
    %v347 = vmul.f32 %v255, %v338
    %v348 = vmul.f32 %v260, %v343
    %v349 = vadd.f32 %v346, %v347
    %v350 = vadd.f32 %v349, %v348
    %v351 = vrot.slane %v350, 4
    %v352 = vadd.f32 %v350, %v351
    %v353 = vrot.slane %v352, 2
    %v354 = vadd.f32 %v352, %v353
    %v355 = vrot.slane %v354, 1
    %v356 = vadd.f32 %v354, %v355
    %357 = vst [vmem:[#allocation8] sm:$0x1] %v356
    // Predicated region
    $region30: #{tpu_custom_call.1} parent=1 // pred_check
      _
    $region31: #{tpu_custom_call.1} parent=1 // pred_check_branch
      %359 = sbr.rel (0) target = $region33
    $region32: #{tpu_custom_call.1} parent=1 // pred_region
      %s361 = ssub.s32 16, 16
      %362 = vsyncadd [#allocation4], %s361
      %s364 = sshll.u32 [#allocation8], 4
      %s365 = int_to_ptr.vmem [resolvable:$true] %s364
      %367 = dma.vmem_to_hbm [thread:$0]  %s365, 16, %s4, [#allocation4]
    $region33: #{tpu_custom_call.1} parent=1 // pred_fallthru
      _
    // Predicated region
    $region34: #{tpu_custom_call.1} parent=1 // pred_check
      _
    $region35: #{tpu_custom_call.1} parent=1 // pred_check_branch
      %369 = sbr.rel (0) target = $region37
    $region36: #{tpu_custom_call.1} parent=1 // pred_region
      %370 = dma.done [#allocation4], 16
    $region37: #{tpu_custom_call.1} parent=1 // pred_fallthru
      _
    %371 = vsyncpa [#allocation3], 1
    %372 = vsyncpa [#allocation6], 1
    %373 = vsyncpa [#allocation4], 1

</llo_original>
